<compile_context>
chip_gen: v7x
topology: tpu7x:2x2x1
jax: 0.10.0
libtpu: 0.0.40
codegen_flags: <defaults>
</compile_context>

<pallas_src>
import math

import jax
import jax.numpy as jnp
from jax.experimental import pallas as pl

# ---- model hyperparameters (small, consistent with the module) ----
BATCH = 2
SEQ_LEN = 16
INPUT_DIM = 4
PROJ_DIM = 8
TCN_OUT = 16
NUM_LEVELS = 2
KERNEL_SIZE = 3
BLOCK_DILATIONS = tuple(2 ** i for i in range(NUM_LEVELS))


# ---------------- fused Pallas kernel ----------------

def make_fused_kernel(block_structure):
    """block_structure: static tuple of (dilation, has_downsample) per block."""
    K = KERNEL_SIZE

    def kernel(*refs):
        it = iter(refs)
        x_ref = next(it)        # (N, Din)  N = B*T, batch-major rows
        t_ref = next(it)        # (N, 1) int32, within-batch time index
        wp_ref = next(it)       # (Din, P)
        pe_ref = next(it)       # (N, P)  PE tiled over batch, Linear bias folded in

        N = x_ref.shape[0]
        t_idx = t_ref[...]      # (N, 1)

        # input projection + positional encoding (Linear bias folded into pe)
        h = jnp.dot(x_ref[...], wp_ref[...],
                    preferred_element_type=jnp.float32) + pe_ref[...]

        def causal_conv(h, w_ref, b_ref, dilation):
            """Causal dilated conv as one im2col matmul.

            h: (N, Cin). w_ref: (K*Cin, Cout) with rows [k*Cin:(k+1)*Cin] = tap k.
            Tap k reads the input delayed by (K-1-k)*dilation; rows that would
            reach before the start of their own batch element are zeroed via
            the within-batch time index (keeps batches independent after the
            batch flatten).
            """
            Cin = h.shape[-1]
            taps = []
            for k in range(K):
                delay = (K - 1 - k) * dilation
                if delay == 0:
                    taps.append(h)
                else:
                    shifted = jnp.concatenate(
                        [jnp.zeros((delay, Cin), h.dtype), h[:N - delay, :]],
                        axis=0)
                    taps.append(jnp.where(t_idx < delay, 0.0, shifted))
            slab = jnp.concatenate(taps, axis=-1)             # (N, K*Cin)
            y = jnp.dot(slab, w_ref[...], preferred_element_type=jnp.float32)
            return y + b_ref[...]

        # TCN temporal blocks (dropout == identity in eval mode)
        for dilation, has_ds in block_structure:
            w1_ref = next(it); b1_ref = next(it)
            w2_ref = next(it); b2_ref = next(it)
            if has_ds:
                wd_ref = next(it); bd_ref = next(it)
            o = jnp.maximum(causal_conv(h, w1_ref, b1_ref, dilation), 0.0)
            o = jnp.maximum(causal_conv(o, w2_ref, b2_ref, dilation), 0.0)
            if has_ds:
                res = jnp.dot(h, wd_ref[...],
                              preferred_element_type=jnp.float32) + bd_ref[...]
            else:
                res = h
            h = jnp.maximum(o + res, 0.0)

        # final LayerNorm over channels (f32 stats)
        gamma_ref = next(it); beta_ref = next(it); o_ref = next(it)
        mean = jnp.mean(h, axis=-1, keepdims=True)
        var = jnp.mean((h - mean) ** 2, axis=-1, keepdims=True)
        y = (h - mean) * jax.lax.rsqrt(var + 1e-5)
        o_ref[...] = (y * gamma_ref[...] + beta_ref[...]).astype(o_ref.dtype)

    return kernel


@jax.jit
def pallas_forward(x, params):
    B, T, Din = x.shape
    C = params['gamma'].shape[-1]
    N = B * T

    # PE (+ folded Linear bias) tiled over batch, done once per trace in XLA.
    weight_args = [params['wp'], jnp.tile(params['pe_b'][:T], (B, 1))]
    block_structure = []
    for d, blk in zip(BLOCK_DILATIONS, params['blocks']):
        weight_args += [blk['w1'], blk['b1'], blk['w2'], blk['b2']]
        has_ds = blk['wd'] is not None
        if has_ds:
            weight_args += [blk['wd'], blk['bd']]
        block_structure.append((d, has_ds))
    weight_args += [params['gamma'], params['beta']]

    # Within-batch time index (for per-batch causal masking after the flatten).
    t_idx = jnp.tile(jnp.arange(T, dtype=jnp.int32)[:, None], (B, 1))   # (N, 1)
    x2 = x.reshape(N, Din)

    out = pl.pallas_call(
        make_fused_kernel(tuple(block_structure)),
        out_shape=jax.ShapeDtypeStruct((N, C), jnp.float32),
    )(x2, t_idx, *weight_args)
    return out.reshape(B, T, C)


# ---------------- parameter construction ----------------

def build_positional_encoding(max_len, d_model):
    position = jnp.arange(max_len, dtype=jnp.float32)[:, None]
    div_term = jnp.exp(jnp.arange(0, d_model, 2, dtype=jnp.float32)
                       * (-math.log(10000.0) / d_model))
    pe = jnp.zeros((max_len, d_model), jnp.float32)
    pe = pe.at[:, 0::2].set(jnp.sin(position * div_term))
    pe = pe.at[:, 1::2].set(jnp.cos(position * div_term))
    return pe


def init_raw_params(key):
    """Parameters in PyTorch-native layouts (used by the reference)."""
    keys = jax.random.split(key, 4 + 6 * NUM_LEVELS)
    ki = iter(keys)

    def rand(shape):
        return 0.1 * jax.random.normal(next(ki), shape, dtype=jnp.float32)

    params = {
        'wp': rand((PROJ_DIM, INPUT_DIM)),          # nn.Linear weight (out, in)
        'bp': rand((PROJ_DIM,)),
        'pe': build_positional_encoding(SEQ_LEN, PROJ_DIM),
        'gamma': jnp.ones((TCN_OUT,), jnp.float32),  # LayerNorm default init
        'beta': jnp.zeros((TCN_OUT,), jnp.float32),
        'blocks': [],
    }
    cin = PROJ_DIM
    for _ in range(NUM_LEVELS):
        cout = TCN_OUT
        params['blocks'].append({
            'w1': rand((cout, cin, KERNEL_SIZE)),    # Conv1d weight (out, in, K)
            'b1': rand((cout,)),
            'w2': rand((cout, cout, KERNEL_SIZE)),
            'b2': rand((cout,)),
            'wd': rand((cout, cin, 1)) if cin != cout else None,
            'bd': rand((cout,)) if cin != cout else None,
        })
        cin = cout
    return params


def prepare_params(raw):
    """One-time layout prep so the kernel only ever sees MXU-friendly weights."""
    prepared = {
        'wp': raw['wp'].T,                                  # (Din, P)
        'pe_b': raw['pe'][:SEQ_LEN] + raw['bp'][None, :],   # fold Linear bias in
        'gamma': raw['gamma'].reshape(1, -1),
        'beta': raw['beta'].reshape(1, -1),
        'blocks': [],
    }
    for blk in raw['blocks']:
        cout, cin, K = blk['w1'].shape
        prepared['blocks'].append({
            # tap-stacked: rows [k*Cin:(k+1)*Cin] hold conv tap k -> (K*Cin, Cout)
            'w1': jnp.transpose(blk['w1'], (2, 1, 0)).reshape(K * cin, cout),
            'b1': blk['b1'].reshape(1, cout),
            'w2': jnp.transpose(blk['w2'], (2, 1, 0)).reshape(K * cout, cout),
            'b2': blk['b2'].reshape(1, cout),
            'wd': None if blk['wd'] is None else blk['wd'][:, :, 0].T,
            'bd': None if blk['bd'] is None else blk['bd'].reshape(1, cout),
        })
    return prepared


# ---------------- pure-JAX reference (mirrors the PyTorch module) ----------------

def ref_forward(x, raw):
    y = x @ raw['wp'].T + raw['bp']
    y = y + raw['pe'][None, :x.shape[1]]
    h = jnp.transpose(y, (0, 2, 1))                 # (B, C, T) like PyTorch NCL

    def conv1d(inp, w, b, dil, pad):
        out = jax.lax.conv_general_dilated(
            inp, w, window_strides=(1,), padding=[(pad, pad)],
            rhs_dilation=(dil,), dimension_numbers=('NCH', 'OIH', 'NCH'))
        out = out + b[None, :, None]
        return out[:, :, :out.shape[2] - pad] if pad > 0 else out

    for dil, blk in zip(BLOCK_DILATIONS, raw['blocks']):
        pad = (KERNEL_SIZE - 1) * dil
        o = jax.nn.relu(conv1d(h, blk['w1'], blk['b1'], dil, pad))
        o = jax.nn.relu(conv1d(o, blk['w2'], blk['b2'], dil, pad))
        res = h if blk['wd'] is None else conv1d(h, blk['wd'], blk['bd'], 1, 0)
        h = jax.nn.relu(o + res)

    y = jnp.transpose(h, (0, 2, 1))
    mean = y.mean(-1, keepdims=True)
    var = ((y - mean) ** 2).mean(-1, keepdims=True)
    return (y - mean) / jnp.sqrt(var + 1e-5) * raw['gamma'] + raw['beta']


if __name__ == "__main__":
    key = jax.random.PRNGKey(0)
    pkey, xkey = jax.random.split(key)
    raw = init_raw_params(pkey)
    params = prepare_params(raw)
    x = jax.random.normal(xkey, (BATCH, SEQ_LEN, INPUT_DIM), dtype=jnp.float32)

    out = jax.block_until_ready(pallas_forward(x, params))
    ref = jax.block_until_ready(ref_forward(x, raw))

    assert out.shape == (BATCH, SEQ_LEN, TCN_OUT)
    assert jnp.allclose(out, ref, atol=2e-4, rtol=2e-4), \
        f"max abs diff {jnp.max(jnp.abs(out - ref))}"

    print("KERNEL_OK")
</pallas_src>

<mosaic_0001>
module attributes {stable_mosaic.version = 11 : i64} {
  func.func @kernel(%arg0: memref<32x4xf32, #tpu.memory_space<vmem>>, %arg1: memref<32x1xi32, #tpu.memory_space<vmem>>, %arg2: memref<4x8xf32, #tpu.memory_space<vmem>>, %arg3: memref<32x8xf32, #tpu.memory_space<vmem>>, %arg4: memref<24x16xf32, #tpu.memory_space<vmem>>, %arg5: memref<1x16xf32, #tpu.memory_space<vmem>>, %arg6: memref<48x16xf32, #tpu.memory_space<vmem>>, %arg7: memref<1x16xf32, #tpu.memory_space<vmem>>, %arg8: memref<8x16xf32, #tpu.memory_space<vmem>>, %arg9: memref<1x16xf32, #tpu.memory_space<vmem>>, %arg10: memref<48x16xf32, #tpu.memory_space<vmem>>, %arg11: memref<1x16xf32, #tpu.memory_space<vmem>>, %arg12: memref<48x16xf32, #tpu.memory_space<vmem>>, %arg13: memref<1x16xf32, #tpu.memory_space<vmem>>, %arg14: memref<1x16xf32, #tpu.memory_space<vmem>>, %arg15: memref<1x16xf32, #tpu.memory_space<vmem>>, %arg16: memref<32x16xf32, #tpu.memory_space<vmem>>) attributes {dimension_semantics = [], scalar_prefetch = 0 : i64, scratch_operands = 0 : i64, tpu.core_type = #tpu.core_type<tc>} {
    %c0 = arith.constant 0 : index
    %c0_0 = arith.constant 0 : index
    %0 = vector.load %arg1[%c0, %c0_0] : memref<32x1xi32, #tpu.memory_space<vmem>>, vector<32x1xi32>
    %c0_1 = arith.constant 0 : index
    %c0_2 = arith.constant 0 : index
    %1 = vector.load %arg0[%c0_1, %c0_2] : memref<32x4xf32, #tpu.memory_space<vmem>>, vector<32x4xf32>
    %c0_3 = arith.constant 0 : index
    %c0_4 = arith.constant 0 : index
    %2 = vector.load %arg2[%c0_3, %c0_4] : memref<4x8xf32, #tpu.memory_space<vmem>>, vector<4x8xf32>
    %cst = arith.constant dense<0.000000e+00> : vector<32x8xf32>
    %3 = tpu.matmul %1, %2, %cst {dimension_numbers = #tpu.dot_dimension_numbers<[1], [0], [0], [1], [0, 0, 1, 1], [], []>} : vector<32x4xf32>, vector<4x8xf32>, vector<32x8xf32> -> vector<32x8xf32>
    %c0_5 = arith.constant 0 : index
    %c0_6 = arith.constant 0 : index
    %4 = vector.load %arg3[%c0_5, %c0_6] : memref<32x8xf32, #tpu.memory_space<vmem>>, vector<32x8xf32>
    %5 = arith.addf %3, %4 : vector<32x8xf32>
    %cst_7 = arith.constant 0.000000e+00 : f32
    %6 = vector.broadcast %cst_7 : f32 to vector<2x8xf32>
    %7 = vector.extract_strided_slice %5 {offsets = [0, 0], sizes = [30, 8], strides = [1, 1]} : vector<32x8xf32> to vector<30x8xf32>
    %8 = tpu.concatenate %6, %7 in 0 : vector<2x8xf32>, vector<30x8xf32> -> vector<32x8xf32>
    %c2_i32 = arith.constant 2 : i32
    %9 = vector.broadcast %c2_i32 : i32 to vector<32x1xi32>
    %10 = arith.cmpi slt, %0, %9 : vector<32x1xi32>
    %cst_8 = arith.constant 0.000000e+00 : f32
    %11 = vector.shape_cast %10 : vector<32x1xi1> to vector<32x1xi1>
    %12 = vector.broadcast %11 : vector<32x1xi1> to vector<32x8xi1>
    %13 = vector.broadcast %cst_8 : f32 to vector<32x8xf32>
    %14 = arith.select %12, %13, %8 : vector<32x8xi1>, vector<32x8xf32>
    %cst_9 = arith.constant 0.000000e+00 : f32
    %15 = vector.broadcast %cst_9 : f32 to vector<1x8xf32>
    %16 = vector.extract_strided_slice %5 {offsets = [0, 0], sizes = [31, 8], strides = [1, 1]} : vector<32x8xf32> to vector<31x8xf32>
    %17 = tpu.concatenate %15, %16 in 0 : vector<1x8xf32>, vector<31x8xf32> -> vector<32x8xf32>
    %c1_i32 = arith.constant 1 : i32
    %18 = vector.broadcast %c1_i32 : i32 to vector<32x1xi32>
    %19 = arith.cmpi slt, %0, %18 : vector<32x1xi32>
    %cst_10 = arith.constant 0.000000e+00 : f32
    %20 = vector.shape_cast %19 : vector<32x1xi1> to vector<32x1xi1>
    %21 = vector.broadcast %20 : vector<32x1xi1> to vector<32x8xi1>
    %22 = vector.broadcast %cst_10 : f32 to vector<32x8xf32>
    %23 = arith.select %21, %22, %17 : vector<32x8xi1>, vector<32x8xf32>
    %24 = tpu.concatenate %14, %23, %5 in 1 : vector<32x8xf32>, vector<32x8xf32>, vector<32x8xf32> -> vector<32x24xf32>
    %c0_11 = arith.constant 0 : index
    %c0_12 = arith.constant 0 : index
    %25 = vector.load %arg4[%c0_11, %c0_12] : memref<24x16xf32, #tpu.memory_space<vmem>>, vector<24x16xf32>
    %cst_13 = arith.constant dense<0.000000e+00> : vector<32x16xf32>
    %26 = tpu.matmul %24, %25, %cst_13 {dimension_numbers = #tpu.dot_dimension_numbers<[1], [0], [0], [1], [0, 0, 1, 1], [], []>} : vector<32x24xf32>, vector<24x16xf32>, vector<32x16xf32> -> vector<32x16xf32>
    %c0_14 = arith.constant 0 : index
    %c0_15 = arith.constant 0 : index
    %27 = vector.load %arg5[%c0_14, %c0_15] : memref<1x16xf32, #tpu.memory_space<vmem>>, vector<1x16xf32>
    %28 = vector.broadcast %27 : vector<1x16xf32> to vector<32x16xf32>
    %29 = arith.addf %26, %28 : vector<32x16xf32>
    %cst_16 = arith.constant 0.000000e+00 : f32
    %30 = vector.broadcast %cst_16 : f32 to vector<32x16xf32>
    %31 = arith.maximumf %29, %30 : vector<32x16xf32>
    %cst_17 = arith.constant 0.000000e+00 : f32
    %32 = vector.broadcast %cst_17 : f32 to vector<2x16xf32>
    %33 = vector.extract_strided_slice %31 {offsets = [0, 0], sizes = [30, 16], strides = [1, 1]} : vector<32x16xf32> to vector<30x16xf32>
    %34 = tpu.concatenate %32, %33 in 0 : vector<2x16xf32>, vector<30x16xf32> -> vector<32x16xf32>
    %c2_i32_18 = arith.constant 2 : i32
    %35 = vector.broadcast %c2_i32_18 : i32 to vector<32x1xi32>
    %36 = arith.cmpi slt, %0, %35 : vector<32x1xi32>
    %cst_19 = arith.constant 0.000000e+00 : f32
    %37 = vector.shape_cast %36 : vector<32x1xi1> to vector<32x1xi1>
    %38 = vector.broadcast %37 : vector<32x1xi1> to vector<32x16xi1>
    %39 = vector.broadcast %cst_19 : f32 to vector<32x16xf32>
    %40 = arith.select %38, %39, %34 : vector<32x16xi1>, vector<32x16xf32>
    %cst_20 = arith.constant 0.000000e+00 : f32
    %41 = vector.broadcast %cst_20 : f32 to vector<1x16xf32>
    %42 = vector.extract_strided_slice %31 {offsets = [0, 0], sizes = [31, 16], strides = [1, 1]} : vector<32x16xf32> to vector<31x16xf32>
    %43 = tpu.concatenate %41, %42 in 0 : vector<1x16xf32>, vector<31x16xf32> -> vector<32x16xf32>
    %c1_i32_21 = arith.constant 1 : i32
    %44 = vector.broadcast %c1_i32_21 : i32 to vector<32x1xi32>
    %45 = arith.cmpi slt, %0, %44 : vector<32x1xi32>
    %cst_22 = arith.constant 0.000000e+00 : f32
    %46 = vector.shape_cast %45 : vector<32x1xi1> to vector<32x1xi1>
    %47 = vector.broadcast %46 : vector<32x1xi1> to vector<32x16xi1>
    %48 = vector.broadcast %cst_22 : f32 to vector<32x16xf32>
    %49 = arith.select %47, %48, %43 : vector<32x16xi1>, vector<32x16xf32>
    %50 = tpu.concatenate %40, %49, %31 in 1 : vector<32x16xf32>, vector<32x16xf32>, vector<32x16xf32> -> vector<32x48xf32>
    %c0_23 = arith.constant 0 : index
    %c0_24 = arith.constant 0 : index
    %51 = vector.load %arg6[%c0_23, %c0_24] : memref<48x16xf32, #tpu.memory_space<vmem>>, vector<48x16xf32>
    %cst_25 = arith.constant dense<0.000000e+00> : vector<32x16xf32>
    %52 = tpu.matmul %50, %51, %cst_25 {dimension_numbers = #tpu.dot_dimension_numbers<[1], [0], [0], [1], [0, 0, 1, 1], [], []>} : vector<32x48xf32>, vector<48x16xf32>, vector<32x16xf32> -> vector<32x16xf32>
    %c0_26 = arith.constant 0 : index
    %c0_27 = arith.constant 0 : index
    %53 = vector.load %arg7[%c0_26, %c0_27] : memref<1x16xf32, #tpu.memory_space<vmem>>, vector<1x16xf32>
    %54 = vector.broadcast %53 : vector<1x16xf32> to vector<32x16xf32>
    %55 = arith.addf %52, %54 : vector<32x16xf32>
    %cst_28 = arith.constant 0.000000e+00 : f32
    %56 = vector.broadcast %cst_28 : f32 to vector<32x16xf32>
    %57 = arith.maximumf %55, %56 : vector<32x16xf32>
    %c0_29 = arith.constant 0 : index
    %c0_30 = arith.constant 0 : index
    %58 = vector.load %arg8[%c0_29, %c0_30] : memref<8x16xf32, #tpu.memory_space<vmem>>, vector<8x16xf32>
    %cst_31 = arith.constant dense<0.000000e+00> : vector<32x16xf32>
    %59 = tpu.matmul %5, %58, %cst_31 {dimension_numbers = #tpu.dot_dimension_numbers<[1], [0], [0], [1], [0, 0, 1, 1], [], []>} : vector<32x8xf32>, vector<8x16xf32>, vector<32x16xf32> -> vector<32x16xf32>
    %c0_32 = arith.constant 0 : index
    %c0_33 = arith.constant 0 : index
    %60 = vector.load %arg9[%c0_32, %c0_33] : memref<1x16xf32, #tpu.memory_space<vmem>>, vector<1x16xf32>
    %61 = vector.broadcast %60 : vector<1x16xf32> to vector<32x16xf32>
    %62 = arith.addf %59, %61 : vector<32x16xf32>
    %63 = arith.addf %57, %62 : vector<32x16xf32>
    %cst_34 = arith.constant 0.000000e+00 : f32
    %64 = vector.broadcast %cst_34 : f32 to vector<32x16xf32>
    %65 = arith.maximumf %63, %64 : vector<32x16xf32>
    %cst_35 = arith.constant 0.000000e+00 : f32
    %66 = vector.broadcast %cst_35 : f32 to vector<4x16xf32>
    %67 = vector.extract_strided_slice %65 {offsets = [0, 0], sizes = [28, 16], strides = [1, 1]} : vector<32x16xf32> to vector<28x16xf32>
    %68 = tpu.concatenate %66, %67 in 0 : vector<4x16xf32>, vector<28x16xf32> -> vector<32x16xf32>
    %c4_i32 = arith.constant 4 : i32
    %69 = vector.broadcast %c4_i32 : i32 to vector<32x1xi32>
    %70 = arith.cmpi slt, %0, %69 : vector<32x1xi32>
    %cst_36 = arith.constant 0.000000e+00 : f32
    %71 = vector.shape_cast %70 : vector<32x1xi1> to vector<32x1xi1>
    %72 = vector.broadcast %71 : vector<32x1xi1> to vector<32x16xi1>
    %73 = vector.broadcast %cst_36 : f32 to vector<32x16xf32>
    %74 = arith.select %72, %73, %68 : vector<32x16xi1>, vector<32x16xf32>
    %cst_37 = arith.constant 0.000000e+00 : f32
    %75 = vector.broadcast %cst_37 : f32 to vector<2x16xf32>
    %76 = vector.extract_strided_slice %65 {offsets = [0, 0], sizes = [30, 16], strides = [1, 1]} : vector<32x16xf32> to vector<30x16xf32>
    %77 = tpu.concatenate %75, %76 in 0 : vector<2x16xf32>, vector<30x16xf32> -> vector<32x16xf32>
    %c2_i32_38 = arith.constant 2 : i32
    %78 = vector.broadcast %c2_i32_38 : i32 to vector<32x1xi32>
    %79 = arith.cmpi slt, %0, %78 : vector<32x1xi32>
    %cst_39 = arith.constant 0.000000e+00 : f32
    %80 = vector.shape_cast %79 : vector<32x1xi1> to vector<32x1xi1>
    %81 = vector.broadcast %80 : vector<32x1xi1> to vector<32x16xi1>
    %82 = vector.broadcast %cst_39 : f32 to vector<32x16xf32>
    %83 = arith.select %81, %82, %77 : vector<32x16xi1>, vector<32x16xf32>
    %84 = tpu.concatenate %74, %83, %65 in 1 : vector<32x16xf32>, vector<32x16xf32>, vector<32x16xf32> -> vector<32x48xf32>
    %c0_40 = arith.constant 0 : index
    %c0_41 = arith.constant 0 : index
    %85 = vector.load %arg10[%c0_40, %c0_41] : memref<48x16xf32, #tpu.memory_space<vmem>>, vector<48x16xf32>
    %cst_42 = arith.constant dense<0.000000e+00> : vector<32x16xf32>
    %86 = tpu.matmul %84, %85, %cst_42 {dimension_numbers = #tpu.dot_dimension_numbers<[1], [0], [0], [1], [0, 0, 1, 1], [], []>} : vector<32x48xf32>, vector<48x16xf32>, vector<32x16xf32> -> vector<32x16xf32>
    %c0_43 = arith.constant 0 : index
    %c0_44 = arith.constant 0 : index
    %87 = vector.load %arg11[%c0_43, %c0_44] : memref<1x16xf32, #tpu.memory_space<vmem>>, vector<1x16xf32>
    %88 = vector.broadcast %87 : vector<1x16xf32> to vector<32x16xf32>
    %89 = arith.addf %86, %88 : vector<32x16xf32>
    %cst_45 = arith.constant 0.000000e+00 : f32
    %90 = vector.broadcast %cst_45 : f32 to vector<32x16xf32>
    %91 = arith.maximumf %89, %90 : vector<32x16xf32>
    %cst_46 = arith.constant 0.000000e+00 : f32
    %92 = vector.broadcast %cst_46 : f32 to vector<4x16xf32>
    %93 = vector.extract_strided_slice %91 {offsets = [0, 0], sizes = [28, 16], strides = [1, 1]} : vector<32x16xf32> to vector<28x16xf32>
    %94 = tpu.concatenate %92, %93 in 0 : vector<4x16xf32>, vector<28x16xf32> -> vector<32x16xf32>
    %c4_i32_47 = arith.constant 4 : i32
    %95 = vector.broadcast %c4_i32_47 : i32 to vector<32x1xi32>
    %96 = arith.cmpi slt, %0, %95 : vector<32x1xi32>
    %cst_48 = arith.constant 0.000000e+00 : f32
    %97 = vector.shape_cast %96 : vector<32x1xi1> to vector<32x1xi1>
    %98 = vector.broadcast %97 : vector<32x1xi1> to vector<32x16xi1>
    %99 = vector.broadcast %cst_48 : f32 to vector<32x16xf32>
    %100 = arith.select %98, %99, %94 : vector<32x16xi1>, vector<32x16xf32>
    %cst_49 = arith.constant 0.000000e+00 : f32
    %101 = vector.broadcast %cst_49 : f32 to vector<2x16xf32>
    %102 = vector.extract_strided_slice %91 {offsets = [0, 0], sizes = [30, 16], strides = [1, 1]} : vector<32x16xf32> to vector<30x16xf32>
    %103 = tpu.concatenate %101, %102 in 0 : vector<2x16xf32>, vector<30x16xf32> -> vector<32x16xf32>
    %c2_i32_50 = arith.constant 2 : i32
    %104 = vector.broadcast %c2_i32_50 : i32 to vector<32x1xi32>
    %105 = arith.cmpi slt, %0, %104 : vector<32x1xi32>
    %cst_51 = arith.constant 0.000000e+00 : f32
    %106 = vector.shape_cast %105 : vector<32x1xi1> to vector<32x1xi1>
    %107 = vector.broadcast %106 : vector<32x1xi1> to vector<32x16xi1>
    %108 = vector.broadcast %cst_51 : f32 to vector<32x16xf32>
    %109 = arith.select %107, %108, %103 : vector<32x16xi1>, vector<32x16xf32>
    %110 = tpu.concatenate %100, %109, %91 in 1 : vector<32x16xf32>, vector<32x16xf32>, vector<32x16xf32> -> vector<32x48xf32>
    %c0_52 = arith.constant 0 : index
    %c0_53 = arith.constant 0 : index
    %111 = vector.load %arg12[%c0_52, %c0_53] : memref<48x16xf32, #tpu.memory_space<vmem>>, vector<48x16xf32>
    %cst_54 = arith.constant dense<0.000000e+00> : vector<32x16xf32>
    %112 = tpu.matmul %110, %111, %cst_54 {dimension_numbers = #tpu.dot_dimension_numbers<[1], [0], [0], [1], [0, 0, 1, 1], [], []>} : vector<32x48xf32>, vector<48x16xf32>, vector<32x16xf32> -> vector<32x16xf32>
    %c0_55 = arith.constant 0 : index
    %c0_56 = arith.constant 0 : index
    %113 = vector.load %arg13[%c0_55, %c0_56] : memref<1x16xf32, #tpu.memory_space<vmem>>, vector<1x16xf32>
    %114 = vector.broadcast %113 : vector<1x16xf32> to vector<32x16xf32>
    %115 = arith.addf %112, %114 : vector<32x16xf32>
    %cst_57 = arith.constant 0.000000e+00 : f32
    %116 = vector.broadcast %cst_57 : f32 to vector<32x16xf32>
    %117 = arith.maximumf %115, %116 : vector<32x16xf32>
    %118 = arith.addf %117, %65 : vector<32x16xf32>
    %cst_58 = arith.constant 0.000000e+00 : f32
    %119 = vector.broadcast %cst_58 : f32 to vector<32x16xf32>
    %120 = arith.maximumf %118, %119 : vector<32x16xf32>
    %cst_59 = arith.constant dense<0.000000e+00> : vector<32xf32>
    %121 = vector.multi_reduction <add>, %120, %cst_59 [1] : vector<32x16xf32> to vector<32xf32>
    %122 = vector.shape_cast %121 : vector<32xf32> to vector<32x1xf32>
    %cst_60 = arith.constant 1.600000e+01 : f32
    %123 = vector.broadcast %cst_60 : f32 to vector<32x1xf32>
    %124 = arith.divf %122, %123 : vector<32x1xf32>
    %125 = vector.broadcast %124 : vector<32x1xf32> to vector<32x16xf32>
    %126 = arith.subf %120, %125 : vector<32x16xf32>
    %127 = arith.mulf %126, %126 : vector<32x16xf32>
    %cst_61 = arith.constant dense<0.000000e+00> : vector<32xf32>
    %128 = vector.multi_reduction <add>, %127, %cst_61 [1] : vector<32x16xf32> to vector<32xf32>
    %129 = vector.shape_cast %128 : vector<32xf32> to vector<32x1xf32>
    %cst_62 = arith.constant 1.600000e+01 : f32
    %130 = vector.broadcast %cst_62 : f32 to vector<32x1xf32>
    %131 = arith.divf %129, %130 : vector<32x1xf32>
    %132 = vector.broadcast %124 : vector<32x1xf32> to vector<32x16xf32>
    %133 = arith.subf %120, %132 : vector<32x16xf32>
    %cst_63 = arith.constant 9.99999974E-6 : f32
    %134 = vector.broadcast %cst_63 : f32 to vector<32x1xf32>
    %135 = arith.addf %131, %134 : vector<32x1xf32>
    %136 = math.rsqrt %135 : vector<32x1xf32>
    %137 = vector.broadcast %136 : vector<32x1xf32> to vector<32x16xf32>
    %138 = arith.mulf %133, %137 : vector<32x16xf32>
    %c0_64 = arith.constant 0 : index
    %c0_65 = arith.constant 0 : index
    %139 = vector.load %arg14[%c0_64, %c0_65] : memref<1x16xf32, #tpu.memory_space<vmem>>, vector<1x16xf32>
    %140 = vector.broadcast %139 : vector<1x16xf32> to vector<32x16xf32>
    %141 = arith.mulf %138, %140 : vector<32x16xf32>
    %c0_66 = arith.constant 0 : index
    %c0_67 = arith.constant 0 : index
    %142 = vector.load %arg15[%c0_66, %c0_67] : memref<1x16xf32, #tpu.memory_space<vmem>>, vector<1x16xf32>
    %143 = vector.broadcast %142 : vector<1x16xf32> to vector<32x16xf32>
    %144 = arith.addf %141, %143 : vector<32x16xf32>
    %c0_68 = arith.constant 0 : index
    %c0_69 = arith.constant 0 : index
    %145 = vector.load %arg16[%c0_68, %c0_69] : memref<32x16xf32, #tpu.memory_space<vmem>>, vector<32x16xf32>
    tpu.vector_store %arg16[%c0_68, %c0_69], %144 {strides = array<i32>} : memref<32x16xf32, #tpu.memory_space<vmem>>, vector<32x16xf32>,
    return
  }
}

</mosaic_0001>

<llo_original>
// kernel: pallas_forward.1
$region0: #{pallas_forward.1}
  #allocation0 [shape = 'u32[]', space=smem, size = 0x4, offset = 0x4, fixed_abs, tag = 'smem constant byte address 0x4 - core index']
  #allocation1 [shape = 'u32[144,128]{1,0:T(1,128)}', space=vmem, size = 0x12000, scoped, tag = 'internal scratch']
  %s0 = inlined_call_operand.vmem [shape: f32[32,4], index: 0, kind: input, shape index: {}]
  %s1 = inlined_call_operand.vmem [shape: s32[32,1], index: 1, kind: input, shape index: {}]
  %s2 = inlined_call_operand.vmem [shape: f32[4,8], index: 2, kind: input, shape index: {}]
  %s3 = inlined_call_operand.vmem [shape: f32[32,8], index: 3, kind: input, shape index: {}]
  %s4 = inlined_call_operand.vmem [shape: f32[24,16], index: 4, kind: input, shape index: {}]
  %s5 = inlined_call_operand.vmem [shape: f32[1,16], index: 5, kind: input, shape index: {}]
  %s6 = inlined_call_operand.vmem [shape: f32[48,16], index: 6, kind: input, shape index: {}]
  %s7 = inlined_call_operand.vmem [shape: f32[1,16], index: 7, kind: input, shape index: {}]
  %s8 = inlined_call_operand.vmem [shape: f32[8,16], index: 8, kind: input, shape index: {}]
  %s9 = inlined_call_operand.vmem [shape: f32[1,16], index: 9, kind: input, shape index: {}]
  %s10 = inlined_call_operand.vmem [shape: f32[48,16], index: 10, kind: input, shape index: {}]
  %s11 = inlined_call_operand.vmem [shape: f32[1,16], index: 11, kind: input, shape index: {}]
  %s12 = inlined_call_operand.vmem [shape: f32[48,16], index: 12, kind: input, shape index: {}]
  %s13 = inlined_call_operand.vmem [shape: f32[1,16], index: 13, kind: input, shape index: {}]
  %s14 = inlined_call_operand.vmem [shape: f32[1,16], index: 14, kind: input, shape index: {}]
  %s15 = inlined_call_operand.vmem [shape: f32[1,16], index: 15, kind: input, shape index: {}]
  %s16 = inlined_call_operand.hbm [shape: f32[32,16], index: 16, kind: output, shape index: {}]
  %s17 = sld [smem:[#allocation0]]
  $region74: #{pallas_forward.1} parent=0
    _
  %s19 = ssub.s32 1, %s17
  %s20 = scalar_select 0, %s19, %s17
  $region1: #{pallas_forward.1} parent=0
    #allocation2 [shape = 'u8[16384]{0}', space=vmem, size = 0x4000, scoped, tag = 'output window, operand 0, single buffered']
    #allocation3 [shape = 's32[1]{0}', space=sflag, size = 0x4, scoped, tag = 'scoped memory for pallas_forward.1']
    %21 = vsyncpa [#allocation3], 0
    // Predicated region
    $region2: #{pallas_forward.1} parent=1 // pred_check
      _
    $region3: #{pallas_forward.1} parent=1 // pred_check_branch
      %23 = sbr.rel (0) target = $region5
    $region4: #{pallas_forward.1} parent=1 // pred_region
      _
    $region5: #{pallas_forward.1} parent=1 // pred_fallthru
      _
    // Predicated region
    $region6: #{pallas_forward.1} parent=1 // pred_check
      _
    $region7: #{pallas_forward.1} parent=1 // pred_check_branch
      %25 = sbr.rel (0) target = $region9
    $region8: #{pallas_forward.1} parent=1 // pred_region
      _
    $region9: #{pallas_forward.1} parent=1 // pred_fallthru
      _
    // Predicated region
    $region10: #{pallas_forward.1} parent=1 // pred_check
      _
    $region11: #{pallas_forward.1} parent=1 // pred_check_branch
      %27 = sbr.rel (0) target = $region13
    $region12: #{pallas_forward.1} parent=1 // pred_region
      _
    $region13: #{pallas_forward.1} parent=1 // pred_fallthru
      _
    // Predicated region
    $region14: #{pallas_forward.1} parent=1 // pred_check
      _
    $region15: #{pallas_forward.1} parent=1 // pred_check_branch
      %29 = sbr.rel (0) target = $region17
    $region16: #{pallas_forward.1} parent=1 // pred_region
      _
    $region17: #{pallas_forward.1} parent=1 // pred_fallthru
      _
    // Predicated region
    $region18: #{pallas_forward.1} parent=1 // pred_check
      _
    $region19: #{pallas_forward.1} parent=1 // pred_check_branch
      %31 = sbr.rel (0) target = $region21
    $region20: #{pallas_forward.1} parent=1 // pred_region
      _
    $region21: #{pallas_forward.1} parent=1 // pred_fallthru
      _
    // Predicated region
    $region22: #{pallas_forward.1} parent=1 // pred_check
      _
    $region23: #{pallas_forward.1} parent=1 // pred_check_branch
      %33 = sbr.rel (0) target = $region25
    $region24: #{pallas_forward.1} parent=1 // pred_region
      _
    $region25: #{pallas_forward.1} parent=1 // pred_fallthru
      _
    // Predicated region
    $region26: #{pallas_forward.1} parent=1 // pred_check
      _
    $region27: #{pallas_forward.1} parent=1 // pred_check_branch
      %35 = sbr.rel (0) target = $region29
    $region28: #{pallas_forward.1} parent=1 // pred_region
      _
    $region29: #{pallas_forward.1} parent=1 // pred_fallthru
      _
    // Predicated region
    $region30: #{pallas_forward.1} parent=1 // pred_check
      _
    $region31: #{pallas_forward.1} parent=1 // pred_check_branch
      %37 = sbr.rel (0) target = $region33
    $region32: #{pallas_forward.1} parent=1 // pred_region
      _
    $region33: #{pallas_forward.1} parent=1 // pred_fallthru
      _
    // Predicated region
    $region34: #{pallas_forward.1} parent=1 // pred_check
      _
    $region35: #{pallas_forward.1} parent=1 // pred_check_branch
      %39 = sbr.rel (0) target = $region37
    $region36: #{pallas_forward.1} parent=1 // pred_region
      _
    $region37: #{pallas_forward.1} parent=1 // pred_fallthru
      _
    // Predicated region
    $region38: #{pallas_forward.1} parent=1 // pred_check
      _
    $region39: #{pallas_forward.1} parent=1 // pred_check_branch
      %41 = sbr.rel (0) target = $region41
    $region40: #{pallas_forward.1} parent=1 // pred_region
      _
    $region41: #{pallas_forward.1} parent=1 // pred_fallthru
      _
    // Predicated region
    $region42: #{pallas_forward.1} parent=1 // pred_check
      _
    $region43: #{pallas_forward.1} parent=1 // pred_check_branch
      %43 = sbr.rel (0) target = $region45
    $region44: #{pallas_forward.1} parent=1 // pred_region
      _
    $region45: #{pallas_forward.1} parent=1 // pred_fallthru
      _
    // Predicated region
    $region46: #{pallas_forward.1} parent=1 // pred_check
      _
    $region47: #{pallas_forward.1} parent=1 // pred_check_branch
      %45 = sbr.rel (0) target = $region49
    $region48: #{pallas_forward.1} parent=1 // pred_region
      _
    $region49: #{pallas_forward.1} parent=1 // pred_fallthru
      _
    // Predicated region
    $region50: #{pallas_forward.1} parent=1 // pred_check
      _
    $region51: #{pallas_forward.1} parent=1 // pred_check_branch
      %47 = sbr.rel (0) target = $region53
    $region52: #{pallas_forward.1} parent=1 // pred_region
      _
    $region53: #{pallas_forward.1} parent=1 // pred_fallthru
      _
    // Predicated region
    $region54: #{pallas_forward.1} parent=1 // pred_check
      _
    $region55: #{pallas_forward.1} parent=1 // pred_check_branch
      %49 = sbr.rel (0) target = $region57
    $region56: #{pallas_forward.1} parent=1 // pred_region
      _
    $region57: #{pallas_forward.1} parent=1 // pred_fallthru
      _
    // Predicated region
    $region58: #{pallas_forward.1} parent=1 // pred_check
      _
    $region59: #{pallas_forward.1} parent=1 // pred_check_branch
      %51 = sbr.rel (0) target = $region61
    $region60: #{pallas_forward.1} parent=1 // pred_region
      _
    $region61: #{pallas_forward.1} parent=1 // pred_fallthru
      _
    // Predicated region
    $region62: #{pallas_forward.1} parent=1 // pred_check
      _
    $region63: #{pallas_forward.1} parent=1 // pred_check_branch
      %53 = sbr.rel (0) target = $region65
    $region64: #{pallas_forward.1} parent=1 // pred_region
      _
    $region65: #{pallas_forward.1} parent=1 // pred_fallthru
      _
    %v54 = vld [vmem:[%s1] sm:$0xff]
    %v55 = vld [vmem:[%s1 + $0x8] sm:$0xff]
    %v56 = vld [vmem:[%s1 + $0x10] sm:$0xff]
    %v57 = vld [vmem:[%s1 + $0x18] sm:$0xff]
    %v58 = vld [vmem:[%s0] sm:$0xff]
    %v59 = vld [vmem:[%s0 + $0x8] sm:$0xff]
    %v60 = vld [vmem:[%s0 + $0x10] sm:$0xff]
    %v61 = vld [vmem:[%s0 + $0x18] sm:$0xff]
    %v62 = vld [vmem:[%s2] sm:$0xf]
    %v63 = vld [vmem:[%s3] sm:$0xff]
    %v64 = vld [vmem:[%s3 + $0x8] sm:$0xff]
    %v65 = vld [vmem:[%s3 + $0x10] sm:$0xff]
    %v66 = vld [vmem:[%s3 + $0x18] sm:$0xff]
    %vm67 = vcmask 31744
    %v69 = vsel %vm67, %v58, 0
    %v72 = vsel %vm67, %v59, 0
    %v75 = vsel %vm67, %v60, 0
    %v78 = vsel %vm67, %v61, 0
    %vm80 = vcmask 1043456
    %v82 = vsel %vm80, %v62, 0
    %84 = vmatprep.subr.mxu0 0.0
    %85 = vmatpush1.msra.mxu0 %v82
    %86 = vmatprep.subr.mxu0 0.0
    %87 = vmatpush1.msra.mxu0 0.0
    %88 = vmatprep.subr.mxu0 0.0
    %89 = vmatpush1.msra.mxu0 0.0
    %90 = vmatprep.subr.mxu0 0.0
    %91 = vmatpush1.msra.mxu0 0.0
    %92 = vmatprep.subr.mxu0 0.0
    %93 = vmatpush1.msra.mxu0 0.0
    %94 = vmatprep.subr.mxu0 0.0
    %95 = vmatpush1.msra.mxu0 0.0
    %96 = vmatprep.subr.mxu0 0.0
    %97 = vmatpush1.msra.mxu0 0.0
    %98 = vmatprep.subr.mxu0 0.0
    %99 = vmatpush1.msra.mxu0 0.0
    %100 = vmatprep.subr.mxu0 0.0
    %101 = vmatpush1.msra.mxu0 0.0
    %102 = vmatprep.subr.mxu0 0.0
    %103 = vmatpush1.msra.mxu0 0.0
    %104 = vmatprep.subr.mxu0 0.0
    %105 = vmatpush1.msra.mxu0 0.0
    %106 = vmatprep.subr.mxu0 0.0
    %107 = vmatpush1.msra.mxu0 0.0
    %108 = vmatprep.subr.mxu0 0.0
    %109 = vmatpush1.msra.mxu0 0.0
    %110 = vmatprep.subr.mxu0 0.0
    %111 = vmatpush1.msra.mxu0 0.0
    %112 = vmatprep.subr.mxu0 0.0
    %113 = vmatpush1.msra.mxu0 0.0
    %114 = vmatprep.subr.mxu0 0.0
    %115 = vmatpush1.msra.mxu0 0.0
    %116 = vmatprep.subr.mxu0 0.0
    %117 = vmatpush1.msra.mxu0 0.0
    %118 = vmatprep.subr.mxu0 0.0
    %119 = vmatpush1.msra.mxu0 0.0
    %120 = vmatprep.subr.mxu0 0.0
    %121 = vmatpush1.msra.mxu0 0.0
    %122 = vmatprep.subr.mxu0 0.0
    %123 = vmatpush1.msra.mxu0 0.0
    %124 = vmatprep.subr.mxu0 0.0
    %125 = vmatpush1.msra.mxu0 0.0
    %126 = vmatprep.subr.mxu0 0.0
    %127 = vmatpush1.msra.mxu0 0.0
    %128 = vmatprep.subr.mxu0 0.0
    %129 = vmatpush1.msra.mxu0 0.0
    %130 = vmatprep.subr.mxu0 0.0
    %131 = vmatpush1.msra.mxu0 0.0
    %132 = vmatprep.subr.mxu0 0.0
    %133 = vmatpush1.msra.mxu0 0.0
    %134 = vmatprep.subr.mxu0 0.0
    %135 = vmatpush1.msra.mxu0 0.0
    %136 = vmatprep.subr.mxu0 0.0
    %137 = vmatpush1.msra.mxu0 0.0
    %138 = vmatprep.subr.mxu0 0.0
    %139 = vmatpush1.msra.mxu0 0.0
    %140 = vmatprep.subr.mxu0 0.0
    %141 = vmatpush1.msra.mxu0 0.0
    %142 = vmatprep.subr.mxu0 0.0
    %143 = vmatpush1.msra.mxu0 0.0
    %144 = vmatprep.subr.mxu0 0.0
    %145 = vmatpush1.msra.mxu0 0.0
    %146 = vmatprep.subr.mxu0 0.0
    %147 = vmatpush1.msra.mxu0 0.0
    %148 = vmatprep.mubr.f32.mxu0 0.0
    %149 = vmatmul.mubr.f32.gmra.mrb[0].mxu0 %v69
    %v150 = vpop.f32.mrb[0].mxu0
    %v151 = vadd.f32 %v63, %v150
    %v152 = vpop.f32.mrb[0].mxu0
    %153 = vmatprep.mubr.f32.mxu0 0.0
    %154 = vmatmul.mubr.f32.gmra.mrb[0].mxu0 %v72
    %v155 = vpop.f32.mrb[0].mxu0
    %v156 = vadd.f32 %v64, %v155
    %v157 = vpop.f32.mrb[0].mxu0
    %158 = vmatprep.mubr.f32.mxu0 0.0
    %159 = vmatmul.mubr.f32.gmra.mrb[0].mxu0 %v75
    %v160 = vpop.f32.mrb[0].mxu0
    %v161 = vadd.f32 %v65, %v160
    %v162 = vpop.f32.mrb[0].mxu0
    %163 = vmatprep.mubr.f32.mxu0 0.0
    %164 = vmatmul.mubr.f32.gmra.mrb[0].mxu0 %v78
    %v165 = vpop.f32.mrb[0].mxu0
    %v166 = vadd.f32 %v66, %v165
    %v167 = vpop.f32.mrb[0].mxu0
    %168 = vdwg.mxu0
    %vm173 = vcmask 1041408
    %v174 = vrot.slane %v151, 6
    %v175 = vrot.slane %v156, 6
    %v176 = vsel %vm173, %v174, %v175
    %v177 = vrot.slane %v161, 6
    %v178 = vsel %vm173, %v175, %v177
    %v179 = vrot.slane %v166, 6
    %v180 = vsel %vm173, %v177, %v179
    %v185 = vsel %vm173, 0.0, %v174
    %vm186 = vcmp.lt.s32.totalorder %v54, 2
    %vm187 = vcmp.lt.s32.totalorder %v55, 2
    %vm188 = vcmp.lt.s32.totalorder %v56, 2
    %vm189 = vcmp.lt.s32.totalorder %v57, 2
    %v190 = vsel %vm186, 1, 0
    %v191 = vsel %vm187, 1, 0
    %v192 = vsel %vm188, 1, 0
    %v193 = vsel %vm189, 1, 0
    %194 = vset.pattern.permute.xlu0 0
    %195 = vperm.xlu0 %194, %v190
    %v196 = vpop.permute.xlu0 %195
    %197 = vset.pattern.permute.xlu0 0
    %198 = vperm.xlu0 %197, %v191
    %v199 = vpop.permute.xlu0 %198
    %200 = vset.pattern.permute.xlu0 0
    %201 = vperm.xlu0 %200, %v192
    %v202 = vpop.permute.xlu0 %201
    %203 = vset.pattern.permute.xlu0 0
    %204 = vperm.xlu0 %203, %v193
    %v205 = vpop.permute.xlu0 %204
    %vm206 = vcmp.eq.s32.totalorder %v196, 1
    %vm207 = vcmp.eq.s32.totalorder %v199, 1
    %vm208 = vcmp.eq.s32.totalorder %v202, 1
    %vm209 = vcmp.eq.s32.totalorder %v205, 1
    %v210 = vsel %vm206, 0.0, %v185
    %v211 = vsel %vm207, 0.0, %v176
    %v212 = vsel %vm208, 0.0, %v178
    %v213 = vsel %vm209, 0.0, %v180
    %vm214 = vcmask 1040384
    %v215 = vrot.slane %v151, 7
    %v216 = vrot.slane %v156, 7
    %v217 = vsel %vm214, %v215, %v216
    %v218 = vrot.slane %v161, 7
    %v219 = vsel %vm214, %v216, %v218
    %v220 = vrot.slane %v166, 7
    %v221 = vsel %vm214, %v218, %v220
    %v226 = vsel %vm214, 0.0, %v215
    %vm227 = vcmp.lt.s32.totalorder %v54, 1
    %vm228 = vcmp.lt.s32.totalorder %v55, 1
    %vm229 = vcmp.lt.s32.totalorder %v56, 1
    %vm230 = vcmp.lt.s32.totalorder %v57, 1
    %v231 = vsel %vm227, 1, 0
    %v232 = vsel %vm228, 1, 0
    %v233 = vsel %vm229, 1, 0
    %v234 = vsel %vm230, 1, 0
    %235 = vset.pattern.permute.xlu0 0
    %236 = vperm.xlu0 %235, %v231
    %v237 = vpop.permute.xlu0 %236
    %238 = vset.pattern.permute.xlu0 0
    %239 = vperm.xlu0 %238, %v232
    %v240 = vpop.permute.xlu0 %239
    %241 = vset.pattern.permute.xlu0 0
    %242 = vperm.xlu0 %241, %v233
    %v243 = vpop.permute.xlu0 %242
    %244 = vset.pattern.permute.xlu0 0
    %245 = vperm.xlu0 %244, %v234
    %v246 = vpop.permute.xlu0 %245
    %vm247 = vcmp.eq.s32.totalorder %v237, 1
    %vm248 = vcmp.eq.s32.totalorder %v240, 1
    %vm249 = vcmp.eq.s32.totalorder %v243, 1
    %vm250 = vcmp.eq.s32.totalorder %v246, 1
    %v251 = vsel %vm247, 0.0, %v226
    %v252 = vsel %vm248, 0.0, %v217
    %v253 = vsel %vm249, 0.0, %v219
    %v254 = vsel %vm250, 0.0, %v221
    %259 = vrot.lane.b32.xlu0 %v251, 8
    %v260 = vpop.permute.xlu0 %259
    %261 = vrot.lane.b32.xlu0 %v252, 8
    %v262 = vpop.permute.xlu0 %261
    %263 = vrot.lane.b32.xlu0 %v253, 8
    %v264 = vpop.permute.xlu0 %263
    %265 = vrot.lane.b32.xlu0 %v254, 8
    %v266 = vpop.permute.xlu0 %265
    %271 = vrot.lane.b32.xlu0 %v151, 16
    %v272 = vpop.permute.xlu0 %271
    %273 = vrot.lane.b32.xlu0 %v156, 16
    %v274 = vpop.permute.xlu0 %273
    %275 = vrot.lane.b32.xlu0 %v161, 16
    %v276 = vpop.permute.xlu0 %275
    %277 = vrot.lane.b32.xlu0 %v166, 16
    %v278 = vpop.permute.xlu0 %277
    %vm283 = vcmask 64512
    %v284 = vsel %vm283, %v210, %v260
    %v285 = vsel %vm283, %v211, %v262
    %v286 = vsel %vm283, %v212, %v264
    %v287 = vsel %vm283, %v213, %v266
    %vm288 = vcmask 130048
    %v289 = vsel %vm288, %v284, %v272
    %v290 = vsel %vm288, %v285, %v274
    %v291 = vsel %vm288, %v286, %v276
    %v292 = vsel %vm288, %v287, %v278
    %v293 = vld [vmem:[%s4] sm:$0xff]
    %v294 = vld [vmem:[%s4 + $0x8] sm:$0xff]
    %v295 = vld [vmem:[%s4 + $0x10] sm:$0xff]
    %v296 = vld [vmem:[%s5] sm:$0x1]
    %v298 = vlaneseq
    %v299 = vshrl.u32 %v298, 7
    %v300 = vsub.s32 0, %v299
    %v301 = vrot.slane %v296, %v300
    %vm303 = vcmask 195584
    %v305 = vsel %vm303, %v289, 0
    %v308 = vsel %vm303, %v290, 0
    %v311 = vsel %vm303, %v291, 0
    %v314 = vsel %vm303, %v292, 0
    %316 = vmatprep.subr.mxu0 0.0
    %317 = vmatpush1.msra.mxu0 %v293
    %318 = vmatprep.subr.mxu0 0.0
    %319 = vmatpush1.msra.mxu0 %v294
    %320 = vmatprep.subr.mxu0 0.0
    %321 = vmatpush1.msra.mxu0 %v295
    %322 = vmatprep.subr.mxu0 0.0
    %323 = vmatpush1.msra.mxu0 0.0
    %324 = vmatprep.subr.mxu0 0.0
    %325 = vmatpush1.msra.mxu0 0.0
    %326 = vmatprep.subr.mxu0 0.0
    %327 = vmatpush1.msra.mxu0 0.0
    %328 = vmatprep.subr.mxu0 0.0
    %329 = vmatpush1.msra.mxu0 0.0
    %330 = vmatprep.subr.mxu0 0.0
    %331 = vmatpush1.msra.mxu0 0.0
    %332 = vmatprep.subr.mxu0 0.0
    %333 = vmatpush1.msra.mxu0 0.0
    %334 = vmatprep.subr.mxu0 0.0
    %335 = vmatpush1.msra.mxu0 0.0
    %336 = vmatprep.subr.mxu0 0.0
    %337 = vmatpush1.msra.mxu0 0.0
    %338 = vmatprep.subr.mxu0 0.0
    %339 = vmatpush1.msra.mxu0 0.0
    %340 = vmatprep.subr.mxu0 0.0
    %341 = vmatpush1.msra.mxu0 0.0
    %342 = vmatprep.subr.mxu0 0.0
    %343 = vmatpush1.msra.mxu0 0.0
    %344 = vmatprep.subr.mxu0 0.0
    %345 = vmatpush1.msra.mxu0 0.0
    %346 = vmatprep.subr.mxu0 0.0
    %347 = vmatpush1.msra.mxu0 0.0
    %348 = vmatprep.subr.mxu0 0.0
    %349 = vmatpush1.msra.mxu0 0.0
    %350 = vmatprep.subr.mxu0 0.0
    %351 = vmatpush1.msra.mxu0 0.0
    %352 = vmatprep.subr.mxu0 0.0
    %353 = vmatpush1.msra.mxu0 0.0
    %354 = vmatprep.subr.mxu0 0.0
    %355 = vmatpush1.msra.mxu0 0.0
    %356 = vmatprep.subr.mxu0 0.0
    %357 = vmatpush1.msra.mxu0 0.0
    %358 = vmatprep.subr.mxu0 0.0
    %359 = vmatpush1.msra.mxu0 0.0
    %360 = vmatprep.subr.mxu0 0.0
    %361 = vmatpush1.msra.mxu0 0.0
    %362 = vmatprep.subr.mxu0 0.0
    %363 = vmatpush1.msra.mxu0 0.0
    %364 = vmatprep.subr.mxu0 0.0
    %365 = vmatpush1.msra.mxu0 0.0
    %366 = vmatprep.subr.mxu0 0.0
    %367 = vmatpush1.msra.mxu0 0.0
    %368 = vmatprep.subr.mxu0 0.0
    %369 = vmatpush1.msra.mxu0 0.0
    %370 = vmatprep.subr.mxu0 0.0
    %371 = vmatpush1.msra.mxu0 0.0
    %372 = vmatprep.subr.mxu0 0.0
    %373 = vmatpush1.msra.mxu0 0.0
    %374 = vmatprep.subr.mxu0 0.0
    %375 = vmatpush1.msra.mxu0 0.0
    %376 = vmatprep.subr.mxu0 0.0
    %377 = vmatpush1.msra.mxu0 0.0
    %378 = vmatprep.subr.mxu0 0.0
    %379 = vmatpush1.msra.mxu0 0.0
    %380 = vmatprep.mubr.f32.mxu0 0.0
    %381 = vmatmul.mubr.f32.gmra.mrb[0].mxu0 %v305
    %v382 = vpop.f32.mrb[0].mxu0
    %v383 = vadd.f32 %v301, %v382
    %v384 = vpop.f32.mrb[0].mxu0
    %385 = vmatprep.mubr.f32.mxu0 0.0
    %386 = vmatmul.mubr.f32.gmra.mrb[0].mxu0 %v308
    %v387 = vpop.f32.mrb[0].mxu0
    %v388 = vadd.f32 %v301, %v387
    %v389 = vpop.f32.mrb[0].mxu0
    %390 = vmatprep.mubr.f32.mxu0 0.0
    %391 = vmatmul.mubr.f32.gmra.mrb[0].mxu0 %v311
    %v392 = vpop.f32.mrb[0].mxu0
    %v393 = vadd.f32 %v301, %v392
    %v394 = vpop.f32.mrb[0].mxu0
    %395 = vmatprep.mubr.f32.mxu0 0.0
    %396 = vmatmul.mubr.f32.gmra.mrb[0].mxu0 %v314
    %v397 = vpop.f32.mrb[0].mxu0
    %v398 = vadd.f32 %v301, %v397
    %v399 = vpop.f32.mrb[0].mxu0
    %400 = vdwg.mxu0
    %v401 = vmax.f32 %v383, 0.0
    %v402 = vmax.f32 %v388, 0.0
    %v403 = vmax.f32 %v393, 0.0
    %v404 = vmax.f32 %v398, 0.0
    %v409 = vrot.slane %v401, 6
    %v410 = vrot.slane %v402, 6
    %v411 = vsel %vm173, %v409, %v410
    %v412 = vrot.slane %v403, 6
    %v413 = vsel %vm173, %v410, %v412
    %v414 = vrot.slane %v404, 6
    %v415 = vsel %vm173, %v412, %v414
    %v420 = vsel %vm173, 0.0, %v409
    %v421 = vsel %vm206, 0.0, %v420
    %v422 = vsel %vm207, 0.0, %v411
    %v423 = vsel %vm208, 0.0, %v413
    %v424 = vsel %vm209, 0.0, %v415
    %v425 = vrot.slane %v401, 7
    %v426 = vrot.slane %v402, 7
    %v427 = vsel %vm214, %v425, %v426
    %v428 = vrot.slane %v403, 7
    %v429 = vsel %vm214, %v426, %v428
    %v430 = vrot.slane %v404, 7
    %v431 = vsel %vm214, %v428, %v430
    %v436 = vsel %vm214, 0.0, %v425
    %v437 = vsel %vm247, 0.0, %v436
    %v438 = vsel %vm248, 0.0, %v427
    %v439 = vsel %vm249, 0.0, %v429
    %v440 = vsel %vm250, 0.0, %v431
    %445 = vrot.lane.b32.xlu0 %v437, 16
    %v446 = vpop.permute.xlu0 %445
    %447 = vrot.lane.b32.xlu0 %v438, 16
    %v448 = vpop.permute.xlu0 %447
    %449 = vrot.lane.b32.xlu0 %v439, 16
    %v450 = vpop.permute.xlu0 %449
    %451 = vrot.lane.b32.xlu0 %v440, 16
    %v452 = vpop.permute.xlu0 %451
    %457 = vrot.lane.b32.xlu0 %v401, 32
    %v458 = vpop.permute.xlu0 %457
    %459 = vrot.lane.b32.xlu0 %v402, 32
    %v460 = vpop.permute.xlu0 %459
    %461 = vrot.lane.b32.xlu0 %v403, 32
    %v462 = vpop.permute.xlu0 %461
    %463 = vrot.lane.b32.xlu0 %v404, 32
    %v464 = vpop.permute.xlu0 %463
    %v469 = vsel %vm288, %v421, %v446
    %v470 = vsel %vm288, %v422, %v448
    %v471 = vsel %vm288, %v423, %v450
    %v472 = vsel %vm288, %v424, %v452
    %vm473 = vcmask 261120
    %v474 = vsel %vm473, %v469, %v458
    %v475 = vsel %vm473, %v470, %v460
    %v476 = vsel %vm473, %v471, %v462
    %v477 = vsel %vm473, %v472, %v464
    %v478 = vld [vmem:[%s6] sm:$0xff]
    %v479 = vld [vmem:[%s6 + $0x8] sm:$0xff]
    %v480 = vld [vmem:[%s6 + $0x10] sm:$0xff]
    %v481 = vld [vmem:[%s6 + $0x18] sm:$0xff]
    %v482 = vld [vmem:[%s6 + $0x20] sm:$0xff]
    %v483 = vld [vmem:[%s6 + $0x28] sm:$0xff]
    %v484 = vld [vmem:[%s7] sm:$0x1]
    %v486 = vlaneseq
    %v487 = vshrl.u32 %v486, 7
    %v488 = vsub.s32 0, %v487
    %v489 = vrot.slane %v484, %v488
    %vm491 = vcmask 392192
    %v493 = vsel %vm491, %v474, 0
    %v496 = vsel %vm491, %v475, 0
    %v499 = vsel %vm491, %v476, 0
    %v502 = vsel %vm491, %v477, 0
    %504 = vmatprep.subr.mxu0 0.0
    %505 = vmatpush1.msra.mxu0 %v478
    %506 = vmatprep.subr.mxu0 0.0
    %507 = vmatpush1.msra.mxu0 %v479
    %508 = vmatprep.subr.mxu0 0.0
    %509 = vmatpush1.msra.mxu0 %v480
    %510 = vmatprep.subr.mxu0 0.0
    %511 = vmatpush1.msra.mxu0 %v481
    %512 = vmatprep.subr.mxu0 0.0
    %513 = vmatpush1.msra.mxu0 %v482
    %514 = vmatprep.subr.mxu0 0.0
    %515 = vmatpush1.msra.mxu0 %v483
    %516 = vmatprep.subr.mxu0 0.0
    %517 = vmatpush1.msra.mxu0 0.0
    %518 = vmatprep.subr.mxu0 0.0
    %519 = vmatpush1.msra.mxu0 0.0
    %520 = vmatprep.subr.mxu0 0.0
    %521 = vmatpush1.msra.mxu0 0.0
    %522 = vmatprep.subr.mxu0 0.0
    %523 = vmatpush1.msra.mxu0 0.0
    %524 = vmatprep.subr.mxu0 0.0
    %525 = vmatpush1.msra.mxu0 0.0
    %526 = vmatprep.subr.mxu0 0.0
    %527 = vmatpush1.msra.mxu0 0.0
    %528 = vmatprep.subr.mxu0 0.0
    %529 = vmatpush1.msra.mxu0 0.0
    %530 = vmatprep.subr.mxu0 0.0
    %531 = vmatpush1.msra.mxu0 0.0
    %532 = vmatprep.subr.mxu0 0.0
    %533 = vmatpush1.msra.mxu0 0.0
    %534 = vmatprep.subr.mxu0 0.0
    %535 = vmatpush1.msra.mxu0 0.0
    %536 = vmatprep.subr.mxu0 0.0
    %537 = vmatpush1.msra.mxu0 0.0
    %538 = vmatprep.subr.mxu0 0.0
    %539 = vmatpush1.msra.mxu0 0.0
    %540 = vmatprep.subr.mxu0 0.0
    %541 = vmatpush1.msra.mxu0 0.0
    %542 = vmatprep.subr.mxu0 0.0
    %543 = vmatpush1.msra.mxu0 0.0
    %544 = vmatprep.subr.mxu0 0.0
    %545 = vmatpush1.msra.mxu0 0.0
    %546 = vmatprep.subr.mxu0 0.0
    %547 = vmatpush1.msra.mxu0 0.0
    %548 = vmatprep.subr.mxu0 0.0
    %549 = vmatpush1.msra.mxu0 0.0
    %550 = vmatprep.subr.mxu0 0.0
    %551 = vmatpush1.msra.mxu0 0.0
    %552 = vmatprep.subr.mxu0 0.0
    %553 = vmatpush1.msra.mxu0 0.0
    %554 = vmatprep.subr.mxu0 0.0
    %555 = vmatpush1.msra.mxu0 0.0
    %556 = vmatprep.subr.mxu0 0.0
    %557 = vmatpush1.msra.mxu0 0.0
    %558 = vmatprep.subr.mxu0 0.0
    %559 = vmatpush1.msra.mxu0 0.0
    %560 = vmatprep.subr.mxu0 0.0
    %561 = vmatpush1.msra.mxu0 0.0
    %562 = vmatprep.subr.mxu0 0.0
    %563 = vmatpush1.msra.mxu0 0.0
    %564 = vmatprep.subr.mxu0 0.0
    %565 = vmatpush1.msra.mxu0 0.0
    %566 = vmatprep.subr.mxu0 0.0
    %567 = vmatpush1.msra.mxu0 0.0
    %568 = vmatprep.mubr.f32.mxu0 0.0
    %569 = vmatmul.mubr.f32.gmra.mrb[0].mxu0 %v493
    %v570 = vpop.f32.mrb[0].mxu0
    %v571 = vadd.f32 %v489, %v570
    %v572 = vpop.f32.mrb[0].mxu0
    %573 = vmatprep.mubr.f32.mxu0 0.0
    %574 = vmatmul.mubr.f32.gmra.mrb[0].mxu0 %v496
    %v575 = vpop.f32.mrb[0].mxu0
    %v576 = vadd.f32 %v489, %v575
    %v577 = vpop.f32.mrb[0].mxu0
    %578 = vmatprep.mubr.f32.mxu0 0.0
    %579 = vmatmul.mubr.f32.gmra.mrb[0].mxu0 %v499
    %v580 = vpop.f32.mrb[0].mxu0
    %v581 = vadd.f32 %v489, %v580
    %v582 = vpop.f32.mrb[0].mxu0
    %583 = vmatprep.mubr.f32.mxu0 0.0
    %584 = vmatmul.mubr.f32.gmra.mrb[0].mxu0 %v502
    %v585 = vpop.f32.mrb[0].mxu0
    %v586 = vadd.f32 %v489, %v585
    %v587 = vpop.f32.mrb[0].mxu0
    %588 = vdwg.mxu0
    %v589 = vmax.f32 %v571, 0.0
    %v590 = vmax.f32 %v576, 0.0
    %v591 = vmax.f32 %v581, 0.0
    %v592 = vmax.f32 %v586, 0.0
    %v593 = vld [vmem:[%s8] sm:$0xff]
    %v594 = vld [vmem:[%s9] sm:$0x1]
    %v596 = vlaneseq
    %v597 = vshrl.u32 %v596, 7
    %v598 = vsub.s32 0, %v597
    %v599 = vrot.slane %v594, %v598
    %v601 = vsel %vm283, %v151, 0
    %v603 = vsel %vm283, %v156, 0
    %v605 = vsel %vm283, %v161, 0
    %v607 = vsel %vm283, %v166, 0
    %609 = vmatprep.subr.mxu0 0.0
    %610 = vmatpush1.msra.mxu0 %v593
    %611 = vmatprep.subr.mxu0 0.0
    %612 = vmatpush1.msra.mxu0 0.0
    %613 = vmatprep.subr.mxu0 0.0
    %614 = vmatpush1.msra.mxu0 0.0
    %615 = vmatprep.subr.mxu0 0.0
    %616 = vmatpush1.msra.mxu0 0.0
    %617 = vmatprep.subr.mxu0 0.0
    %618 = vmatpush1.msra.mxu0 0.0
    %619 = vmatprep.subr.mxu0 0.0
    %620 = vmatpush1.msra.mxu0 0.0
    %621 = vmatprep.subr.mxu0 0.0
    %622 = vmatpush1.msra.mxu0 0.0
    %623 = vmatprep.subr.mxu0 0.0
    %624 = vmatpush1.msra.mxu0 0.0
    %625 = vmatprep.subr.mxu0 0.0
    %626 = vmatpush1.msra.mxu0 0.0
    %627 = vmatprep.subr.mxu0 0.0
    %628 = vmatpush1.msra.mxu0 0.0
    %629 = vmatprep.subr.mxu0 0.0
    %630 = vmatpush1.msra.mxu0 0.0
    %631 = vmatprep.subr.mxu0 0.0
    %632 = vmatpush1.msra.mxu0 0.0
    %633 = vmatprep.subr.mxu0 0.0
    %634 = vmatpush1.msra.mxu0 0.0
    %635 = vmatprep.subr.mxu0 0.0
    %636 = vmatpush1.msra.mxu0 0.0
    %637 = vmatprep.subr.mxu0 0.0
    %638 = vmatpush1.msra.mxu0 0.0
    %639 = vmatprep.subr.mxu0 0.0
    %640 = vmatpush1.msra.mxu0 0.0
    %641 = vmatprep.subr.mxu0 0.0
    %642 = vmatpush1.msra.mxu0 0.0
    %643 = vmatprep.subr.mxu0 0.0
    %644 = vmatpush1.msra.mxu0 0.0
    %645 = vmatprep.subr.mxu0 0.0
    %646 = vmatpush1.msra.mxu0 0.0
    %647 = vmatprep.subr.mxu0 0.0
    %648 = vmatpush1.msra.mxu0 0.0
    %649 = vmatprep.subr.mxu0 0.0
    %650 = vmatpush1.msra.mxu0 0.0
    %651 = vmatprep.subr.mxu0 0.0
    %652 = vmatpush1.msra.mxu0 0.0
    %653 = vmatprep.subr.mxu0 0.0
    %654 = vmatpush1.msra.mxu0 0.0
    %655 = vmatprep.subr.mxu0 0.0
    %656 = vmatpush1.msra.mxu0 0.0
    %657 = vmatprep.subr.mxu0 0.0
    %658 = vmatpush1.msra.mxu0 0.0
    %659 = vmatprep.subr.mxu0 0.0
    %660 = vmatpush1.msra.mxu0 0.0
    %661 = vmatprep.subr.mxu0 0.0
    %662 = vmatpush1.msra.mxu0 0.0
    %663 = vmatprep.subr.mxu0 0.0
    %664 = vmatpush1.msra.mxu0 0.0
    %665 = vmatprep.subr.mxu0 0.0
    %666 = vmatpush1.msra.mxu0 0.0
    %667 = vmatprep.subr.mxu0 0.0
    %668 = vmatpush1.msra.mxu0 0.0
    %669 = vmatprep.subr.mxu0 0.0
    %670 = vmatpush1.msra.mxu0 0.0
    %671 = vmatprep.subr.mxu0 0.0
    %672 = vmatpush1.msra.mxu0 0.0
    %673 = vmatprep.mubr.f32.mxu0 0.0
    %674 = vmatmul.mubr.f32.gmra.mrb[0].mxu0 %v601
    %v675 = vpop.f32.mrb[0].mxu0
    %v676 = vadd.f32 %v599, %v675
    %v677 = vpop.f32.mrb[0].mxu0
    %678 = vmatprep.mubr.f32.mxu0 0.0
    %679 = vmatmul.mubr.f32.gmra.mrb[0].mxu0 %v603
    %v680 = vpop.f32.mrb[0].mxu0
    %v681 = vadd.f32 %v599, %v680
    %v682 = vpop.f32.mrb[0].mxu0
    %683 = vmatprep.mubr.f32.mxu0 0.0
    %684 = vmatmul.mubr.f32.gmra.mrb[0].mxu0 %v605
    %v685 = vpop.f32.mrb[0].mxu0
    %v686 = vadd.f32 %v599, %v685
    %v687 = vpop.f32.mrb[0].mxu0
    %688 = vmatprep.mubr.f32.mxu0 0.0
    %689 = vmatmul.mubr.f32.gmra.mrb[0].mxu0 %v607
    %v690 = vpop.f32.mrb[0].mxu0
    %v691 = vadd.f32 %v599, %v690
    %v692 = vpop.f32.mrb[0].mxu0
    %693 = vdwg.mxu0
    %v694 = vadd.f32 %v589, %v676
    %v695 = vadd.f32 %v590, %v681
    %v696 = vadd.f32 %v591, %v686
    %v697 = vadd.f32 %v592, %v691
    %v698 = vmax.f32 %v694, 0.0
    %v699 = vmax.f32 %v695, 0.0
    %v700 = vmax.f32 %v696, 0.0
    %v701 = vmax.f32 %v697, 0.0
    %v706 = vrot.slane %v698, 4
    %v707 = vrot.slane %v699, 4
    %v708 = vsel %vm80, %v706, %v707
    %v709 = vrot.slane %v700, 4
    %v710 = vsel %vm80, %v707, %v709
    %v711 = vrot.slane %v701, 4
    %v712 = vsel %vm80, %v709, %v711
    %v717 = vsel %vm80, 0.0, %v706
    %vm718 = vcmp.lt.s32.totalorder %v54, 4
    %vm719 = vcmp.lt.s32.totalorder %v55, 4
    %vm720 = vcmp.lt.s32.totalorder %v56, 4
    %vm721 = vcmp.lt.s32.totalorder %v57, 4
    %v722 = vsel %vm718, 1, 0
    %v723 = vsel %vm719, 1, 0
    %v724 = vsel %vm720, 1, 0
    %v725 = vsel %vm721, 1, 0
    %726 = vset.pattern.permute.xlu0 0
    %727 = vperm.xlu0 %726, %v722
    %v728 = vpop.permute.xlu0 %727
    %729 = vset.pattern.permute.xlu0 0
    %730 = vperm.xlu0 %729, %v723
    %v731 = vpop.permute.xlu0 %730
    %732 = vset.pattern.permute.xlu0 0
    %733 = vperm.xlu0 %732, %v724
    %v734 = vpop.permute.xlu0 %733
    %735 = vset.pattern.permute.xlu0 0
    %736 = vperm.xlu0 %735, %v725
    %v737 = vpop.permute.xlu0 %736
    %vm738 = vcmp.eq.s32.totalorder %v728, 1
    %vm739 = vcmp.eq.s32.totalorder %v731, 1
    %vm740 = vcmp.eq.s32.totalorder %v734, 1
    %vm741 = vcmp.eq.s32.totalorder %v737, 1
    %v742 = vsel %vm738, 0.0, %v717
    %v743 = vsel %vm739, 0.0, %v708
    %v744 = vsel %vm740, 0.0, %v710
    %v745 = vsel %vm741, 0.0, %v712
    %v746 = vrot.slane %v698, 6
    %v747 = vrot.slane %v699, 6
    %v748 = vsel %vm173, %v746, %v747
    %v749 = vrot.slane %v700, 6
    %v750 = vsel %vm173, %v747, %v749
    %v751 = vrot.slane %v701, 6
    %v752 = vsel %vm173, %v749, %v751
    %v757 = vsel %vm173, 0.0, %v746
    %v758 = vsel %vm206, 0.0, %v757
    %v759 = vsel %vm207, 0.0, %v748
    %v760 = vsel %vm208, 0.0, %v750
    %v761 = vsel %vm209, 0.0, %v752
    %766 = vrot.lane.b32.xlu0 %v758, 16
    %v767 = vpop.permute.xlu0 %766
    %768 = vrot.lane.b32.xlu0 %v759, 16
    %v769 = vpop.permute.xlu0 %768
    %770 = vrot.lane.b32.xlu0 %v760, 16
    %v771 = vpop.permute.xlu0 %770
    %772 = vrot.lane.b32.xlu0 %v761, 16
    %v773 = vpop.permute.xlu0 %772
    %778 = vrot.lane.b32.xlu0 %v698, 32
    %v779 = vpop.permute.xlu0 %778
    %780 = vrot.lane.b32.xlu0 %v699, 32
    %v781 = vpop.permute.xlu0 %780
    %782 = vrot.lane.b32.xlu0 %v700, 32
    %v783 = vpop.permute.xlu0 %782
    %784 = vrot.lane.b32.xlu0 %v701, 32
    %v785 = vpop.permute.xlu0 %784
    %v790 = vsel %vm288, %v742, %v767
    %v791 = vsel %vm288, %v743, %v769
    %v792 = vsel %vm288, %v744, %v771
    %v793 = vsel %vm288, %v745, %v773
    %v794 = vsel %vm473, %v790, %v779
    %v795 = vsel %vm473, %v791, %v781
    %v796 = vsel %vm473, %v792, %v783
    %v797 = vsel %vm473, %v793, %v785
    %v798 = vld [vmem:[%s10] sm:$0xff]
    %v799 = vld [vmem:[%s10 + $0x8] sm:$0xff]
    %v800 = vld [vmem:[%s10 + $0x10] sm:$0xff]
    %v801 = vld [vmem:[%s10 + $0x18] sm:$0xff]
    %v802 = vld [vmem:[%s10 + $0x20] sm:$0xff]
    %v803 = vld [vmem:[%s10 + $0x28] sm:$0xff]
    %v804 = vld [vmem:[%s11] sm:$0x1]
    %v806 = vlaneseq
    %v807 = vshrl.u32 %v806, 7
    %v808 = vsub.s32 0, %v807
    %v809 = vrot.slane %v804, %v808
    %v812 = vsel %vm491, %v794, 0
    %v815 = vsel %vm491, %v795, 0
    %v818 = vsel %vm491, %v796, 0
    %v821 = vsel %vm491, %v797, 0
    %823 = vmatprep.subr.mxu0 0.0
    %824 = vmatpush1.msra.mxu0 %v798
    %825 = vmatprep.subr.mxu0 0.0
    %826 = vmatpush1.msra.mxu0 %v799
    %827 = vmatprep.subr.mxu0 0.0
    %828 = vmatpush1.msra.mxu0 %v800
    %829 = vmatprep.subr.mxu0 0.0
    %830 = vmatpush1.msra.mxu0 %v801
    %831 = vmatprep.subr.mxu0 0.0
    %832 = vmatpush1.msra.mxu0 %v802
    %833 = vmatprep.subr.mxu0 0.0
    %834 = vmatpush1.msra.mxu0 %v803
    %835 = vmatprep.subr.mxu0 0.0
    %836 = vmatpush1.msra.mxu0 0.0
    %837 = vmatprep.subr.mxu0 0.0
    %838 = vmatpush1.msra.mxu0 0.0
    %839 = vmatprep.subr.mxu0 0.0
    %840 = vmatpush1.msra.mxu0 0.0
    %841 = vmatprep.subr.mxu0 0.0
    %842 = vmatpush1.msra.mxu0 0.0
    %843 = vmatprep.subr.mxu0 0.0
    %844 = vmatpush1.msra.mxu0 0.0
    %845 = vmatprep.subr.mxu0 0.0
    %846 = vmatpush1.msra.mxu0 0.0
    %847 = vmatprep.subr.mxu0 0.0
    %848 = vmatpush1.msra.mxu0 0.0
    %849 = vmatprep.subr.mxu0 0.0
    %850 = vmatpush1.msra.mxu0 0.0
    %851 = vmatprep.subr.mxu0 0.0
    %852 = vmatpush1.msra.mxu0 0.0
    %853 = vmatprep.subr.mxu0 0.0
    %854 = vmatpush1.msra.mxu0 0.0
    %855 = vmatprep.subr.mxu0 0.0
    %856 = vmatpush1.msra.mxu0 0.0
    %857 = vmatprep.subr.mxu0 0.0
    %858 = vmatpush1.msra.mxu0 0.0
    %859 = vmatprep.subr.mxu0 0.0
    %860 = vmatpush1.msra.mxu0 0.0
    %861 = vmatprep.subr.mxu0 0.0
    %862 = vmatpush1.msra.mxu0 0.0
    %863 = vmatprep.subr.mxu0 0.0
    %864 = vmatpush1.msra.mxu0 0.0
    %865 = vmatprep.subr.mxu0 0.0
    %866 = vmatpush1.msra.mxu0 0.0
    %867 = vmatprep.subr.mxu0 0.0
    %868 = vmatpush1.msra.mxu0 0.0
    %869 = vmatprep.subr.mxu0 0.0
    %870 = vmatpush1.msra.mxu0 0.0
    %871 = vmatprep.subr.mxu0 0.0
    %872 = vmatpush1.msra.mxu0 0.0
    %873 = vmatprep.subr.mxu0 0.0
    %874 = vmatpush1.msra.mxu0 0.0
    %875 = vmatprep.subr.mxu0 0.0
    %876 = vmatpush1.msra.mxu0 0.0
    %877 = vmatprep.subr.mxu0 0.0
    %878 = vmatpush1.msra.mxu0 0.0
    %879 = vmatprep.subr.mxu0 0.0
    %880 = vmatpush1.msra.mxu0 0.0
    %881 = vmatprep.subr.mxu0 0.0
    %882 = vmatpush1.msra.mxu0 0.0
    %883 = vmatprep.subr.mxu0 0.0
    %884 = vmatpush1.msra.mxu0 0.0
    %885 = vmatprep.subr.mxu0 0.0
    %886 = vmatpush1.msra.mxu0 0.0
    %887 = vmatprep.mubr.f32.mxu0 0.0
    %888 = vmatmul.mubr.f32.gmra.mrb[0].mxu0 %v812
    %v889 = vpop.f32.mrb[0].mxu0
    %v890 = vadd.f32 %v809, %v889
    %v891 = vpop.f32.mrb[0].mxu0
    %892 = vmatprep.mubr.f32.mxu0 0.0
    %893 = vmatmul.mubr.f32.gmra.mrb[0].mxu0 %v815
    %v894 = vpop.f32.mrb[0].mxu0
    %v895 = vadd.f32 %v809, %v894
    %v896 = vpop.f32.mrb[0].mxu0
    %897 = vmatprep.mubr.f32.mxu0 0.0
    %898 = vmatmul.mubr.f32.gmra.mrb[0].mxu0 %v818
    %v899 = vpop.f32.mrb[0].mxu0
    %v900 = vadd.f32 %v809, %v899
    %v901 = vpop.f32.mrb[0].mxu0
    %902 = vmatprep.mubr.f32.mxu0 0.0
    %903 = vmatmul.mubr.f32.gmra.mrb[0].mxu0 %v821
    %v904 = vpop.f32.mrb[0].mxu0
    %v905 = vadd.f32 %v809, %v904
    %v906 = vpop.f32.mrb[0].mxu0
    %907 = vdwg.mxu0
    %v908 = vmax.f32 %v890, 0.0
    %v909 = vmax.f32 %v895, 0.0
    %v910 = vmax.f32 %v900, 0.0
    %v911 = vmax.f32 %v905, 0.0
    %v916 = vrot.slane %v908, 4
    %v917 = vrot.slane %v909, 4
    %v918 = vsel %vm80, %v916, %v917
    %v919 = vrot.slane %v910, 4
    %v920 = vsel %vm80, %v917, %v919
    %v921 = vrot.slane %v911, 4
    %v922 = vsel %vm80, %v919, %v921
    %v927 = vsel %vm80, 0.0, %v916
    %v928 = vsel %vm738, 0.0, %v927
    %v929 = vsel %vm739, 0.0, %v918
    %v930 = vsel %vm740, 0.0, %v920
    %v931 = vsel %vm741, 0.0, %v922
    %v932 = vrot.slane %v908, 6
    %v933 = vrot.slane %v909, 6
    %v934 = vsel %vm173, %v932, %v933
    %v935 = vrot.slane %v910, 6
    %v936 = vsel %vm173, %v933, %v935
    %v937 = vrot.slane %v911, 6
    %v938 = vsel %vm173, %v935, %v937
    %v943 = vsel %vm173, 0.0, %v932
    %v944 = vsel %vm206, 0.0, %v943
    %v945 = vsel %vm207, 0.0, %v934
    %v946 = vsel %vm208, 0.0, %v936
    %v947 = vsel %vm209, 0.0, %v938
    %952 = vrot.lane.b32.xlu0 %v944, 16
    %v953 = vpop.permute.xlu0 %952
    %954 = vrot.lane.b32.xlu0 %v945, 16
    %v955 = vpop.permute.xlu0 %954
    %956 = vrot.lane.b32.xlu0 %v946, 16
    %v957 = vpop.permute.xlu0 %956
    %958 = vrot.lane.b32.xlu0 %v947, 16
    %v959 = vpop.permute.xlu0 %958
    %964 = vrot.lane.b32.xlu0 %v908, 32
    %v965 = vpop.permute.xlu0 %964
    %966 = vrot.lane.b32.xlu0 %v909, 32
    %v967 = vpop.permute.xlu0 %966
    %968 = vrot.lane.b32.xlu0 %v910, 32
    %v969 = vpop.permute.xlu0 %968
    %970 = vrot.lane.b32.xlu0 %v911, 32
    %v971 = vpop.permute.xlu0 %970
    %v976 = vsel %vm288, %v928, %v953
    %v977 = vsel %vm288, %v929, %v955
    %v978 = vsel %vm288, %v930, %v957
    %v979 = vsel %vm288, %v931, %v959
    %v980 = vsel %vm473, %v976, %v965
    %v981 = vsel %vm473, %v977, %v967
    %v982 = vsel %vm473, %v978, %v969
    %v983 = vsel %vm473, %v979, %v971
    %v984 = vld [vmem:[%s12] sm:$0xff]
    %v985 = vld [vmem:[%s12 + $0x8] sm:$0xff]
    %v986 = vld [vmem:[%s12 + $0x10] sm:$0xff]
    %v987 = vld [vmem:[%s12 + $0x18] sm:$0xff]
    %v988 = vld [vmem:[%s12 + $0x20] sm:$0xff]
    %v989 = vld [vmem:[%s12 + $0x28] sm:$0xff]
    %v990 = vld [vmem:[%s13] sm:$0x1]
    %v992 = vlaneseq
    %v993 = vshrl.u32 %v992, 7
    %v994 = vsub.s32 0, %v993
    %v995 = vrot.slane %v990, %v994
    %v998 = vsel %vm491, %v980, 0
    %v1001 = vsel %vm491, %v981, 0
    %v1004 = vsel %vm491, %v982, 0
    %v1007 = vsel %vm491, %v983, 0
    %1009 = vmatprep.subr.mxu0 0.0
    %1010 = vmatpush1.msra.mxu0 %v984
    %1011 = vmatprep.subr.mxu0 0.0
    %1012 = vmatpush1.msra.mxu0 %v985
    %1013 = vmatprep.subr.mxu0 0.0
    %1014 = vmatpush1.msra.mxu0 %v986
    %1015 = vmatprep.subr.mxu0 0.0
    %1016 = vmatpush1.msra.mxu0 %v987
    %1017 = vmatprep.subr.mxu0 0.0
    %1018 = vmatpush1.msra.mxu0 %v988
    %1019 = vmatprep.subr.mxu0 0.0
    %1020 = vmatpush1.msra.mxu0 %v989
    %1021 = vmatprep.subr.mxu0 0.0
    %1022 = vmatpush1.msra.mxu0 0.0
    %1023 = vmatprep.subr.mxu0 0.0
    %1024 = vmatpush1.msra.mxu0 0.0
    %1025 = vmatprep.subr.mxu0 0.0
    %1026 = vmatpush1.msra.mxu0 0.0
    %1027 = vmatprep.subr.mxu0 0.0
    %1028 = vmatpush1.msra.mxu0 0.0
    %1029 = vmatprep.subr.mxu0 0.0
    %1030 = vmatpush1.msra.mxu0 0.0
    %1031 = vmatprep.subr.mxu0 0.0
    %1032 = vmatpush1.msra.mxu0 0.0
    %1033 = vmatprep.subr.mxu0 0.0
    %1034 = vmatpush1.msra.mxu0 0.0
    %1035 = vmatprep.subr.mxu0 0.0
    %1036 = vmatpush1.msra.mxu0 0.0
    %1037 = vmatprep.subr.mxu0 0.0
    %1038 = vmatpush1.msra.mxu0 0.0
    %1039 = vmatprep.subr.mxu0 0.0
    %1040 = vmatpush1.msra.mxu0 0.0
    %1041 = vmatprep.subr.mxu0 0.0
    %1042 = vmatpush1.msra.mxu0 0.0
    %1043 = vmatprep.subr.mxu0 0.0
    %1044 = vmatpush1.msra.mxu0 0.0
    %1045 = vmatprep.subr.mxu0 0.0
    %1046 = vmatpush1.msra.mxu0 0.0
    %1047 = vmatprep.subr.mxu0 0.0
    %1048 = vmatpush1.msra.mxu0 0.0
    %1049 = vmatprep.subr.mxu0 0.0
    %1050 = vmatpush1.msra.mxu0 0.0
    %1051 = vmatprep.subr.mxu0 0.0
    %1052 = vmatpush1.msra.mxu0 0.0
    %1053 = vmatprep.subr.mxu0 0.0
    %1054 = vmatpush1.msra.mxu0 0.0
    %1055 = vmatprep.subr.mxu0 0.0
    %1056 = vmatpush1.msra.mxu0 0.0
    %1057 = vmatprep.subr.mxu0 0.0
    %1058 = vmatpush1.msra.mxu0 0.0
    %1059 = vmatprep.subr.mxu0 0.0
    %1060 = vmatpush1.msra.mxu0 0.0
    %1061 = vmatprep.subr.mxu0 0.0
    %1062 = vmatpush1.msra.mxu0 0.0
    %1063 = vmatprep.subr.mxu0 0.0
    %1064 = vmatpush1.msra.mxu0 0.0
    %1065 = vmatprep.subr.mxu0 0.0
    %1066 = vmatpush1.msra.mxu0 0.0
    %1067 = vmatprep.subr.mxu0 0.0
    %1068 = vmatpush1.msra.mxu0 0.0
    %1069 = vmatprep.subr.mxu0 0.0
    %1070 = vmatpush1.msra.mxu0 0.0
    %1071 = vmatprep.subr.mxu0 0.0
    %1072 = vmatpush1.msra.mxu0 0.0
    %1073 = vmatprep.mubr.f32.mxu0 0.0
    %1074 = vmatmul.mubr.f32.gmra.mrb[0].mxu0 %v998
    %v1075 = vpop.f32.mrb[0].mxu0
    %v1076 = vadd.f32 %v995, %v1075
    %v1077 = vpop.f32.mrb[0].mxu0
    %1078 = vmatprep.mubr.f32.mxu0 0.0
    %1079 = vmatmul.mubr.f32.gmra.mrb[0].mxu0 %v1001
    %v1080 = vpop.f32.mrb[0].mxu0
    %v1081 = vadd.f32 %v995, %v1080
    %v1082 = vpop.f32.mrb[0].mxu0
    %1083 = vmatprep.mubr.f32.mxu0 0.0
    %1084 = vmatmul.mubr.f32.gmra.mrb[0].mxu0 %v1004
    %v1085 = vpop.f32.mrb[0].mxu0
    %v1086 = vadd.f32 %v995, %v1085
    %v1087 = vpop.f32.mrb[0].mxu0
    %1088 = vmatprep.mubr.f32.mxu0 0.0
    %1089 = vmatmul.mubr.f32.gmra.mrb[0].mxu0 %v1007
    %v1090 = vpop.f32.mrb[0].mxu0
    %v1091 = vadd.f32 %v995, %v1090
    %v1092 = vpop.f32.mrb[0].mxu0
    %1093 = vdwg.mxu0
    %v1094 = vmax.f32 %v1076, 0.0
    %v1095 = vmax.f32 %v1081, 0.0
    %v1096 = vmax.f32 %v1086, 0.0
    %v1097 = vmax.f32 %v1091, 0.0
    %v1098 = vadd.f32 %v1094, %v698
    %v1099 = vadd.f32 %v1095, %v699
    %v1100 = vadd.f32 %v1096, %v700
    %v1101 = vadd.f32 %v1097, %v701
    %v1102 = vmax.f32 %v1098, 0.0
    %v1103 = vmax.f32 %v1099, 0.0
    %v1104 = vmax.f32 %v1100, 0.0
    %v1105 = vmax.f32 %v1101, 0.0
    %v1106 = vsel %vm288, %v1102, 0.0
    %1107 = vadd.xlane.f32.xlu0 %v1106
    %v1108 = vpop.xlane.xlu0 %1107
    %v1109 = vsel %vm288, %v1103, 0.0
    %1110 = vadd.xlane.f32.xlu0 %v1109
    %v1111 = vpop.xlane.xlu0 %1110
    %v1112 = vsel %vm288, %v1104, 0.0
    %1113 = vadd.xlane.f32.xlu0 %v1112
    %v1114 = vpop.xlane.xlu0 %1113
    %v1115 = vsel %vm288, %v1105, 0.0
    %1116 = vadd.xlane.f32.xlu0 %v1115
    %v1117 = vpop.xlane.xlu0 %1116
    %v1118 = vrcp.pop 16.0
    %v1119 = vmul.f32 %v1108, %v1118
    %v1120 = vmul.f32 %v1111, %v1118
    %v1121 = vmul.f32 %v1114, %v1118
    %v1122 = vmul.f32 %v1117, %v1118
    %v1123 = vsub.f32 %v1102, %v1119
    %v1124 = vsub.f32 %v1103, %v1120
    %v1125 = vsub.f32 %v1104, %v1121
    %v1126 = vsub.f32 %v1105, %v1122
    %v1127 = vmul.f32 %v1123, %v1123
    %v1128 = vmul.f32 %v1124, %v1124
    %v1129 = vmul.f32 %v1125, %v1125
    %v1130 = vmul.f32 %v1126, %v1126
    %v1131 = vsel %vm288, %v1127, 0.0
    %1132 = vadd.xlane.f32.xlu0 %v1131
    %v1133 = vpop.xlane.xlu0 %1132
    %v1134 = vsel %vm288, %v1128, 0.0
    %1135 = vadd.xlane.f32.xlu0 %v1134
    %v1136 = vpop.xlane.xlu0 %1135
    %v1137 = vsel %vm288, %v1129, 0.0
    %1138 = vadd.xlane.f32.xlu0 %v1137
    %v1139 = vpop.xlane.xlu0 %1138
    %v1140 = vsel %vm288, %v1130, 0.0
    %1141 = vadd.xlane.f32.xlu0 %v1140
    %v1142 = vpop.xlane.xlu0 %1141
    %v1143 = vmul.f32 %v1133, %v1118
    %v1144 = vmul.f32 %v1136, %v1118
    %v1145 = vmul.f32 %v1139, %v1118
    %v1146 = vmul.f32 %v1142, %v1118
    %v1147 = vadd.f32 %v1143, 1e-05
    %v1148 = vadd.f32 %v1144, 1e-05
    %v1149 = vadd.f32 %v1145, 1e-05
    %v1150 = vadd.f32 %v1146, 1e-05
    %v1151 = vrsqrt.pop %v1147
    %v1152 = vrsqrt.pop %v1148
    %v1153 = vrsqrt.pop %v1149
    %v1154 = vrsqrt.pop %v1150
    %v1155 = vmul.f32 %v1123, %v1151
    %v1156 = vmul.f32 %v1124, %v1152
    %v1157 = vmul.f32 %v1125, %v1153
    %v1158 = vmul.f32 %v1126, %v1154
    %v1159 = vld [vmem:[%s14] sm:$0x1]
    %v1161 = vlaneseq
    %v1162 = vshrl.u32 %v1161, 7
    %v1163 = vsub.s32 0, %v1162
    %v1164 = vrot.slane %v1159, %v1163
    %v1166 = vmul.f32 %v1155, %v1164
    %v1167 = vmul.f32 %v1156, %v1164
    %v1168 = vmul.f32 %v1157, %v1164
    %v1169 = vmul.f32 %v1158, %v1164
    %v1170 = vld [vmem:[%s15] sm:$0x1]
    %v1172 = vlaneseq
    %v1173 = vshrl.u32 %v1172, 7
    %v1174 = vsub.s32 0, %v1173
    %v1175 = vrot.slane %v1170, %v1174
    %v1177 = vadd.f32 %v1166, %v1175
    %v1178 = vadd.f32 %v1167, %v1175
    %v1179 = vadd.f32 %v1168, %v1175
    %v1180 = vadd.f32 %v1169, %v1175
    %1181 = vst.msk [vmem:[#allocation2] sm:$0xff] %vm288, %v1177
    %1182 = vst.msk [vmem:[#allocation2 + $0x8] sm:$0xff] %vm288, %v1178
    %1183 = vst.msk [vmem:[#allocation2 + $0x10] sm:$0xff] %vm288, %v1179
    %1184 = vst.msk [vmem:[#allocation2 + $0x18] sm:$0xff] %vm288, %v1180
    // Predicated region
    $region66: #{pallas_forward.1} parent=1 // pred_check
      _
    $region67: #{pallas_forward.1} parent=1 // pred_check_branch
      %1186 = sbr.rel (0) target = $region69
    $region68: #{pallas_forward.1} parent=1 // pred_region
      %s1188 = ssub.s32 512, 512
      %1189 = vsyncadd [#allocation3], %s1188
      %s1190 = sshll.u32 [#allocation2], 4
      %s1191 = int_to_ptr.vmem [resolvable:$true] %s1190
      %1196 = dma.vmem_to_hbm [thread:$0]  %s1191, 512, %s16, [#allocation3], 128, 128, 8
    $region69: #{pallas_forward.1} parent=1 // pred_fallthru
      _
    // Predicated region
    $region70: #{pallas_forward.1} parent=1 // pred_check
      _
    $region71: #{pallas_forward.1} parent=1 // pred_check_branch
      %1198 = sbr.rel (0) target = $region73
    $region72: #{pallas_forward.1} parent=1 // pred_region
      %1199 = dma.done [#allocation3], 512
    $region73: #{pallas_forward.1} parent=1 // pred_fallthru
      _
    %1200 = vsyncpa [#allocation3], 1

</llo_original>
